<compile_context>
chip_gen: v7x
topology: tpu7x:2x2x1
jax: 0.10.0
libtpu: 0.0.40
codegen_flags: <defaults>
</compile_context>

<pallas_src>
import jax
import jax.numpy as jnp
from jax.experimental import pallas as pl
from jax.experimental.pallas import tpu as pltpu


def attention_pooling_kernel(seq_ref, mask_ref, w1_ref, b1_ref, w2_ref, out_ref):
    tb, s, d = seq_ref.shape          # (TB, S, D) block
    h_dim = w1_ref.shape[1]

    seq = seq_ref[...]                # native dtype (f32 here, bf16 in prod)

    # --- Linear(D -> H) + tanh (MXU matmul, EUP tanh) ------------------------
    # Collapsing (TB, S) -> TB*S keeps D on the lane axis (sublane merge only,
    # no relayout); the old (B*S,1)->(B,S) scores relayout is gone entirely.
    x2d = seq.reshape(tb * s, d)
    h = jnp.tanh(
        jnp.dot(x2d, w1_ref[...], preferred_element_type=jnp.float32)
        + b1_ref[...]                                   # (1, H) bias broadcast
    ).reshape(tb, s, h_dim)                             # (TB, S, H), f32

    # --- Linear(H -> 1) as VPU multiply + lane reduce -------------------------
    # A matmul with a 1-lane output wastes a full MXU pass; a small H
    # contraction is cheaper as broadcast-multiply + reduce over lanes.
    scores = jnp.sum(h * w2_ref[...], axis=-1, keepdims=True)   # (TB, S, 1)
    # NOTE: b2 (bias of the H->1 Linear) is a constant shift along the
    # sequence axis and cancels in the softmax, so it is not applied.

    # --- mask + softmax over the sequence (sublane) axis ----------------------
    scores = jnp.where(mask_ref[...] == 0, jnp.float32(-1e9), scores)
    m = jnp.max(scores, axis=1, keepdims=True)          # (TB, 1, 1)
    e = jnp.exp(scores - m)                             # EUP
    denom = jnp.sum(e, axis=1, keepdims=True)           # (TB, 1, 1)
    w = e * pl.reciprocal(denom, approx=True)           # EUP reciprocal (free slot)

    # --- weighted sum over the sequence axis ----------------------------------
    # w broadcasts over lanes; reduction over S is a sublane reduce.  For very
    # large S this would be better expressed as einsum('bs,bsd->bd') on the MXU.
    pooled = jnp.sum(w * seq.astype(jnp.float32), axis=1, keepdims=True)  # (TB,1,D)
    out_ref[...] = pooled.astype(out_ref.dtype)


def _auto_block_b(batch, seq_len, input_dim, itemsize, budget_bytes=8 << 20):
    """Largest batch tile whose double-buffered seq slab stays well below the
    scoped-VMEM defaults on every generation (v7x: 64 MiB physical / 32 MiB
    default scoped — hence the conservative 8 MiB seq budget)."""
    row_bytes = max(1, seq_len * input_dim * itemsize)
    cap = max(1, min(512, budget_bytes // (2 * row_bytes)))
    tb = min(batch, cap)
    while batch % tb:                 # keep the grid exact (no partial blocks)
        tb -= 1
    return tb


def attention_pooling(sequence, mask, w1, b1, w2, b2=None, *, block_b=None):
    """sequence: [B, S, D]; mask: [B, S] (0 => masked out);
    w1: [D, H], b1: [1, H] or [H], w2: [H, 1], b2 unused (cancels in softmax)."""
    B, S, D = sequence.shape
    H = w1.shape[1]
    if block_b is None:
        block_b = _auto_block_b(B, S, D, sequence.dtype.itemsize)
    assert B % block_b == 0, "batch tile must divide batch"
    grid = (B // block_b,)

    # Keep the sequence axis on sublanes everywhere: mask as (B, S, 1) and
    # output as (B, 1, D) so block shapes only constrain full-sized minor dims.
    mask3 = mask.reshape(B, S, 1)
    w2_row = w2.reshape(1, H)          # row vector for the VPU contraction
    b1_row = b1.reshape(1, H)

    out3 = pl.pallas_call(
        attention_pooling_kernel,
        out_shape=jax.ShapeDtypeStruct((B, 1, D), sequence.dtype),
        grid=grid,
        in_specs=[
            pl.BlockSpec((block_b, S, D), lambda i: (i, 0, 0)),
            pl.BlockSpec((block_b, S, 1), lambda i: (i, 0, 0)),
            # Weights: constant block index -> fetched once, resident in VMEM.
            pl.BlockSpec((D, H), lambda i: (0, 0)),
            pl.BlockSpec((1, H), lambda i: (0, 0)),
            pl.BlockSpec((1, H), lambda i: (0, 0)),
        ],
        out_specs=pl.BlockSpec((block_b, 1, D), lambda i: (i, 0, 0)),
        compiler_params=pltpu.CompilerParams(
            # Batch tiles are independent: shard across v7x's 2 TensorCores.
            dimension_semantics=("parallel",),
        ),
    )(sequence, mask3, w1, b1_row, w2_row)
    return out3.reshape(B, D)


def reference(seq, mask, w1, b1, w2, b2):
    h = jnp.tanh(seq @ w1 + b1[0])                     # (B, S, H)
    scores = (h @ w2 + b2[0])[..., 0]                  # (B, S)
    scores = jnp.where(mask == 0, -1e9, scores)
    w = jax.nn.softmax(scores, axis=-1)
    return jnp.sum(w[..., None] * seq, axis=1)


if __name__ == "__main__":
    B, S, D, H = 16, 8, 16, 64    # batch, seq_len, input_dim, hidden_dim

    key = jax.random.PRNGKey(0)
    k_seq, k_w1, k_b1, k_w2, k_b2, k_mask = jax.random.split(key, 6)

    seq = jax.random.normal(k_seq, (B, S, D), dtype=jnp.float32)

    # Linear stores y = x @ W + b here (W is the transpose of torch's (out,in)).
    w1 = jax.random.normal(k_w1, (D, H), dtype=jnp.float32) * 0.1
    b1 = jax.random.normal(k_b1, (1, H), dtype=jnp.float32) * 0.1
    w2 = jax.random.normal(k_w2, (H, 1), dtype=jnp.float32) * 0.1
    b2 = jax.random.normal(k_b2, (1, 1), dtype=jnp.float32) * 0.1

    # Float mask with zeros (0 => masked out); at least one valid position/row.
    mask = (jax.random.uniform(k_mask, (B, S)) > 0.25).astype(jnp.float32)
    mask = mask.at[:, 0].set(1.0)

    out = attention_pooling(seq, mask, w1, b1, w2, b2, block_b=8)  # 2 grid steps
    out = jax.block_until_ready(out)

    ref = reference(seq, mask, w1, b1, w2, b2)
    assert out.shape == (B, D)
    # Tolerance accounts only for the EUP approximate reciprocal used in the
    # softmax normalization; all other math is exact f32.
    err = jnp.max(jnp.abs(out - ref))
    assert jnp.allclose(out, ref, atol=1e-2, rtol=1e-2), f"max abs err {err}"

    print("KERNEL_OK")
</pallas_src>

<mosaic_0001>
module attributes {stable_mosaic.version = 11 : i64} {
  func.func @attention_pooling_kernel(%arg0: i32, %arg1: memref<8x8x16xf32, #tpu.memory_space<vmem>>, %arg2: memref<8x8x1xf32, #tpu.memory_space<vmem>>, %arg3: memref<16x64xf32, #tpu.memory_space<vmem>>, %arg4: memref<1x64xf32, #tpu.memory_space<vmem>>, %arg5: memref<1x64xf32, #tpu.memory_space<vmem>>, %arg6: memref<8x1x16xf32, #tpu.memory_space<vmem>>) attributes {dimension_semantics = [#tpu.dimension_semantics<parallel>], iteration_bounds = array<i64: 2>, scalar_prefetch = 0 : i64, scratch_operands = 0 : i64, tpu.core_type = #tpu.core_type<tc>, window_params = [{transform_indices = @transform_0, window_bounds = array<i64: 8, 8, 16>}, {transform_indices = @transform_1, window_bounds = array<i64: 8, 8, 1>}, {pipeline_mode = #tpu.pipeline_mode<synchronous>, transform_indices = @transform_2, window_bounds = array<i64: 16, 64>}, {pipeline_mode = #tpu.pipeline_mode<synchronous>, transform_indices = @transform_3, window_bounds = array<i64: 1, 64>}, {pipeline_mode = #tpu.pipeline_mode<synchronous>, transform_indices = @transform_4, window_bounds = array<i64: 1, 64>}, {transform_indices = @transform_5, window_bounds = array<i64: 8, 1, 16>}]} {
    %c0 = arith.constant 0 : index
    %c0_0 = arith.constant 0 : index
    %c0_1 = arith.constant 0 : index
    %0 = vector.load %arg1[%c0, %c0_0, %c0_1] : memref<8x8x16xf32, #tpu.memory_space<vmem>>, vector<8x8x16xf32>
    %1 = vector.shape_cast %0 : vector<8x8x16xf32> to vector<64x16xf32>
    %c0_2 = arith.constant 0 : index
    %c0_3 = arith.constant 0 : index
    %2 = vector.load %arg3[%c0_2, %c0_3] : memref<16x64xf32, #tpu.memory_space<vmem>>, vector<16x64xf32>
    %cst = arith.constant dense<0.000000e+00> : vector<64x64xf32>
    %3 = tpu.matmul %1, %2, %cst {dimension_numbers = #tpu.dot_dimension_numbers<[1], [0], [0], [1], [0, 0, 1, 1], [], []>} : vector<64x16xf32>, vector<16x64xf32>, vector<64x64xf32> -> vector<64x64xf32>
    %c0_4 = arith.constant 0 : index
    %c0_5 = arith.constant 0 : index
    %4 = vector.load %arg4[%c0_4, %c0_5] : memref<1x64xf32, #tpu.memory_space<vmem>>, vector<1x64xf32>
    %5 = vector.broadcast %4 : vector<1x64xf32> to vector<64x64xf32>
    %6 = arith.addf %3, %5 : vector<64x64xf32>
    %7 = math.tanh %6 : vector<64x64xf32>
    %8 = vector.shape_cast %7 : vector<64x64xf32> to vector<8x8x64xf32>
    %c0_6 = arith.constant 0 : index
    %c0_7 = arith.constant 0 : index
    %9 = vector.load %arg5[%c0_6, %c0_7] : memref<1x64xf32, #tpu.memory_space<vmem>>, vector<1x64xf32>
    %10 = vector.shape_cast %9 : vector<1x64xf32> to vector<1x1x64xf32>
    %11 = vector.broadcast %10 : vector<1x1x64xf32> to vector<8x8x64xf32>
    %12 = arith.mulf %8, %11 : vector<8x8x64xf32>
    %cst_8 = arith.constant dense<0.000000e+00> : vector<8x8xf32>
    %13 = vector.multi_reduction <add>, %12, %cst_8 [2] : vector<8x8x64xf32> to vector<8x8xf32>
    %14 = vector.shape_cast %13 : vector<8x8xf32> to vector<8x8x1xf32>
    %c0_9 = arith.constant 0 : index
    %c0_10 = arith.constant 0 : index
    %c0_11 = arith.constant 0 : index
    %15 = vector.load %arg2[%c0_9, %c0_10, %c0_11] : memref<8x8x1xf32, #tpu.memory_space<vmem>>, vector<8x8x1xf32>
    %cst_12 = arith.constant 0.000000e+00 : f32
    %16 = vector.broadcast %cst_12 : f32 to vector<8x8x1xf32>
    %17 = arith.cmpf oeq, %15, %16 : vector<8x8x1xf32>
    %cst_13 = arith.constant -1.000000e+09 : f32
    %18 = vector.broadcast %cst_13 : f32 to vector<8x8x1xf32>
    %19 = arith.select %17, %18, %14 : vector<8x8x1xi1>, vector<8x8x1xf32>
    %cst_14 = arith.constant dense<0xFF800000> : vector<8x1xf32>
    %20 = vector.multi_reduction <maximumf>, %19, %cst_14 [1] : vector<8x8x1xf32> to vector<8x1xf32>
    %21 = vector.shape_cast %20 : vector<8x1xf32> to vector<8x1x1xf32>
    %22 = vector.broadcast %21 : vector<8x1x1xf32> to vector<8x8x1xf32>
    %23 = arith.subf %19, %22 : vector<8x8x1xf32>
    %24 = math.exp %23 : vector<8x8x1xf32>
    %cst_15 = arith.constant dense<0.000000e+00> : vector<8x1xf32>
    %25 = vector.multi_reduction <add>, %24, %cst_15 [1] : vector<8x8x1xf32> to vector<8x1xf32>
    %26 = vector.shape_cast %25 : vector<8x1xf32> to vector<8x1x1xf32>
    %27 = tpu.reciprocal %26 {approx = true} : vector<8x1x1xf32> -> vector<8x1x1xf32>
    %28 = vector.broadcast %27 : vector<8x1x1xf32> to vector<8x8x1xf32>
    %29 = arith.mulf %24, %28 : vector<8x8x1xf32>
    %30 = vector.broadcast %29 : vector<8x8x1xf32> to vector<8x8x16xf32>
    %31 = arith.mulf %30, %0 : vector<8x8x16xf32>
    %cst_16 = arith.constant dense<0.000000e+00> : vector<8x16xf32>
    %32 = vector.multi_reduction <add>, %31, %cst_16 [1] : vector<8x8x16xf32> to vector<8x16xf32>
    %33 = vector.shape_cast %32 : vector<8x16xf32> to vector<8x1x16xf32>
    %c0_17 = arith.constant 0 : index
    %c0_18 = arith.constant 0 : index
    %c0_19 = arith.constant 0 : index
    %34 = vector.load %arg6[%c0_17, %c0_18, %c0_19] : memref<8x1x16xf32, #tpu.memory_space<vmem>>, vector<8x1x16xf32>
    tpu.vector_store %arg6[%c0_17, %c0_18, %c0_19], %33 {strides = array<i32>} : memref<8x1x16xf32, #tpu.memory_space<vmem>>, vector<8x1x16xf32>,
    return
  }
  func.func @transform_0(%arg0: i32) -> (i32, i32, i32) {
    %c0_i32 = arith.constant 0 : i32
    %c0_i32_0 = arith.constant 0 : i32
    %c0_i32_1 = arith.constant 0 : i32
    return %arg0, %c0_i32, %c0_i32_0 : i32, i32, i32
  }
  func.func @transform_1(%arg0: i32) -> (i32, i32, i32) {
    %c0_i32 = arith.constant 0 : i32
    %c0_i32_0 = arith.constant 0 : i32
    %c0_i32_1 = arith.constant 0 : i32
    return %arg0, %c0_i32, %c0_i32_0 : i32, i32, i32
  }
  func.func @transform_2(%arg0: i32) -> (i32, i32) {
    %c0_i32 = arith.constant 0 : i32
    %c0_i32_0 = arith.constant 0 : i32
    %c0_i32_1 = arith.constant 0 : i32
    return %c0_i32, %c0_i32_0 : i32, i32
  }
  func.func @transform_3(%arg0: i32) -> (i32, i32) {
    %c0_i32 = arith.constant 0 : i32
    %c0_i32_0 = arith.constant 0 : i32
    %c0_i32_1 = arith.constant 0 : i32
    return %c0_i32, %c0_i32_0 : i32, i32
  }
  func.func @transform_4(%arg0: i32) -> (i32, i32) {
    %c0_i32 = arith.constant 0 : i32
    %c0_i32_0 = arith.constant 0 : i32
    %c0_i32_1 = arith.constant 0 : i32
    return %c0_i32, %c0_i32_0 : i32, i32
  }
  func.func @transform_5(%arg0: i32) -> (i32, i32, i32) {
    %c0_i32 = arith.constant 0 : i32
    %c0_i32_0 = arith.constant 0 : i32
    %c0_i32_1 = arith.constant 0 : i32
    return %arg0, %c0_i32, %c0_i32_0 : i32, i32, i32
  }
}

</mosaic_0001>

<llo_original>
// kernel: tpu_custom_call.1
$region0: #{tpu_custom_call.1}
  #allocation0 [shape = 'u32[]', space=smem, size = 0x4, offset = 0x4, fixed_abs, tag = 'smem constant byte address 0x4 - core index']
  #allocation1 [shape = 'u32[144,128]{1,0:T(1,128)}', space=vmem, size = 0x12000, scoped, tag = 'internal scratch']
  %s0 = inlined_call_operand.vmem [shape: f32[16,8,16], index: 0, kind: input, shape index: {}]
  %s1 = inlined_call_operand.vmem [shape: f32[16,8,1], index: 1, kind: input, shape index: {}]
  %s2 = inlined_call_operand.hbm [shape: f32[16,64], index: 2, kind: input, shape index: {}]
  %s3 = inlined_call_operand.vmem [shape: f32[1,64], index: 3, kind: input, shape index: {}]
  %s4 = inlined_call_operand.vmem [shape: f32[1,64], index: 4, kind: input, shape index: {}]
  %s5 = inlined_call_operand.hbm [shape: f32[16,1,16], index: 5, kind: output, shape index: {}]
  %s6 = sld [smem:[#allocation0]]
  $region57: #{tpu_custom_call.1} parent=0
    _
  %s8 = ssub.s32 1, %s6
  %s9 = scalar_select 0, %s8, %s6
  $region1: #{tpu_custom_call.1} parent=0
    #allocation2 [shape = 'u8[8192]{0}', space=vmem, size = 0x2000, scoped, tag = 'input window, operand 2, single buffered']
    #allocation3 [shape = 's32[2]{0}', space=sflag, size = 0x8, scoped, tag = 'scoped memory for tpu_custom_call.1']
    #allocation4 [shape = 's32[2]{0}', space=sflag, size = 0x8, scoped, tag = 'scoped memory for tpu_custom_call.1']
    #allocation5 [shape = 'u8[8192]{0}', space=vmem, size = 0x2000, scoped, tag = 'output window, operand 0']
    %10 = vsyncpa [#allocation3], 0
    %11 = vsyncpa [#allocation4], 0
    %s12 = scalar_lea.sflag [#allocation4], 1
    %13 = vsyncpa %s12, 0
    loop: start=0, step=1, limit=4
    $region2: #{tpu_custom_call.1} parent=1 // loop_pre_header
      _
    $region3: #{tpu_custom_call.1} parent=1 // loop_header
      %s15 = sphi 0, %s19
      %p16 = scmp.ge.s32.totalorder %s15, 4
      %s25 = sphi 0, %s27
      %s28 = sphi 0, %s25
      %s29 = sphi 0, %s28
      %s45 = sphi 0, %s29
      %s51 = sphi 0, %s53
      %s54 = sphi 0, %s51
      %s55 = sphi 0, %s54
      %s71 = sphi 0, %s55
      %s75 = sphi 0, %s75
      %s77 = sphi 0, %s75
      %s78 = sphi 0, %s77
      %s92 = sphi 0, %s78
      %s96 = sphi 0, %s96
      %s98 = sphi 0, %s96
      %s99 = sphi 0, %s98
      %s113 = sphi 0, %s99
      %s117 = sphi 0, %s117
      %s119 = sphi 0, %s117
      %s120 = sphi 0, %s119
      %s134 = sphi 0, %s120
      %s140 = sphi 0, %s142
      %s143 = sphi 0, %s140
      %s144 = sphi 0, %s143
      %s160 = sphi 0, %s144
    $region4: #{tpu_custom_call.1} parent=1 // loop_header_branch
      %18 = sbr.rel (%p16) target = $region8
    $region5: #{tpu_custom_call.1} parent=1 // loop_body
      %s20 = ssub.s32 %s15, 1
      %s21 = ssub.s32 %s15, 2
      %s22 = sadd.s32 %s15, 1
      %s23 = ssub.s32 %s15, %s22
      %p24 = scmp.eq.s32.totalorder %s23, 0
      %s26 = sadd.s32 %s25, 1
      %s27 = scalar_select %p24, %s25, %s26
      %p30 = pneg %p24
      %p31 = scmp.eq.s32.totalorder %s15, 1
      %p32 = por %p30, %p31
      %p33 = scmp.ne.s32.totalorder %s25, %s28
      %p34 = scmp.eq.s32.totalorder %s15, 0
      %p35 = por %p33, %p34
      %p36 = scmp.ne.s32.totalorder %s25, %s28
      %p37 = scmp.eq.s32.totalorder %s20, 1
      %p38 = por %p36, %p37
      %p39 = scmp.ne.s32.totalorder %s28, %s29
      %p40 = scmp.eq.s32.totalorder %s20, 0
      %p41 = por %p39, %p40
      %p42 = scmp.ne.s32.totalorder %s28, %s29
      %p43 = scmp.eq.s32.totalorder %s21, 1
      %p44 = por %p42, %p43
      %p46 = scmp.ne.s32.totalorder %s29, %s45
      %p47 = scmp.eq.s32.totalorder %s21, 0
      %p48 = por %p46, %p47
      %s49 = ssub.s32 %s15, %s22
      %p50 = scmp.eq.s32.totalorder %s49, 0
      %s52 = sadd.s32 %s51, 1
      %s53 = scalar_select %p50, %s51, %s52
      %p56 = pneg %p50
      %p57 = scmp.eq.s32.totalorder %s15, 1
      %p58 = por %p56, %p57
      %p59 = scmp.ne.s32.totalorder %s51, %s54
      %p60 = scmp.eq.s32.totalorder %s15, 0
      %p61 = por %p59, %p60
      %p62 = scmp.ne.s32.totalorder %s51, %s54
      %p63 = scmp.eq.s32.totalorder %s20, 1
      %p64 = por %p62, %p63
      %p65 = scmp.ne.s32.totalorder %s54, %s55
      %p66 = scmp.eq.s32.totalorder %s20, 0
      %p67 = por %p65, %p66
      %p68 = scmp.ne.s32.totalorder %s54, %s55
      %p69 = scmp.eq.s32.totalorder %s21, 1
      %p70 = por %p68, %p69
      %p72 = scmp.ne.s32.totalorder %s55, %s71
      %p73 = scmp.eq.s32.totalorder %s21, 0
      %p74 = por %p72, %p73
      %s76 = sadd.s32 %s75, 1
      %p79 = scmp.eq.s32.totalorder %s15, 1
      %p80 = scmp.ne.s32.totalorder %s75, %s77
      %p81 = scmp.eq.s32.totalorder %s15, 0
      %p82 = por %p80, %p81
      %p83 = scmp.ne.s32.totalorder %s75, %s77
      %p84 = scmp.eq.s32.totalorder %s20, 1
      %p85 = por %p83, %p84
      %p86 = scmp.ne.s32.totalorder %s77, %s78
      %p87 = scmp.eq.s32.totalorder %s20, 0
      %p88 = por %p86, %p87
      %p89 = scmp.ne.s32.totalorder %s77, %s78
      %p90 = scmp.eq.s32.totalorder %s21, 1
      %p91 = por %p89, %p90
      %p93 = scmp.ne.s32.totalorder %s78, %s92
      %p94 = scmp.eq.s32.totalorder %s21, 0
      %p95 = por %p93, %p94
      %s97 = sadd.s32 %s96, 1
      %p100 = scmp.eq.s32.totalorder %s15, 1
      %p101 = scmp.ne.s32.totalorder %s96, %s98
      %p102 = scmp.eq.s32.totalorder %s15, 0
      %p103 = por %p101, %p102
      %p104 = scmp.ne.s32.totalorder %s96, %s98
      %p105 = scmp.eq.s32.totalorder %s20, 1
      %p106 = por %p104, %p105
      %p107 = scmp.ne.s32.totalorder %s98, %s99
      %p108 = scmp.eq.s32.totalorder %s20, 0
      %p109 = por %p107, %p108
      %p110 = scmp.ne.s32.totalorder %s98, %s99
      %p111 = scmp.eq.s32.totalorder %s21, 1
      %p112 = por %p110, %p111
      %p114 = scmp.ne.s32.totalorder %s99, %s113
      %p115 = scmp.eq.s32.totalorder %s21, 0
      %p116 = por %p114, %p115
      %s118 = sadd.s32 %s117, 1
      %p121 = scmp.eq.s32.totalorder %s15, 1
      %p122 = scmp.ne.s32.totalorder %s117, %s119
      %p123 = scmp.eq.s32.totalorder %s15, 0
      %p124 = por %p122, %p123
      %p125 = scmp.ne.s32.totalorder %s117, %s119
      %p126 = scmp.eq.s32.totalorder %s20, 1
      %p127 = por %p125, %p126
      %p128 = scmp.ne.s32.totalorder %s119, %s120
      %p129 = scmp.eq.s32.totalorder %s20, 0
      %p130 = por %p128, %p129
      %p131 = scmp.ne.s32.totalorder %s119, %s120
      %p132 = scmp.eq.s32.totalorder %s21, 1
      %p133 = por %p131, %p132
      %p135 = scmp.ne.s32.totalorder %s120, %s134
      %p136 = scmp.eq.s32.totalorder %s21, 0
      %p137 = por %p135, %p136
      %s138 = ssub.s32 %s15, %s22
      %p139 = scmp.eq.s32.totalorder %s138, 0
      %s141 = sadd.s32 %s140, 1
      %s142 = scalar_select %p139, %s140, %s141
      %p145 = pneg %p139
      %p146 = scmp.eq.s32.totalorder %s15, 1
      %p147 = por %p145, %p146
      %p148 = scmp.ne.s32.totalorder %s140, %s143
      %p149 = scmp.eq.s32.totalorder %s15, 0
      %p150 = por %p148, %p149
      %p151 = scmp.ne.s32.totalorder %s140, %s143
      %p152 = scmp.eq.s32.totalorder %s20, 1
      %p153 = por %p151, %p152
      %p154 = scmp.ne.s32.totalorder %s143, %s144
      %p155 = scmp.eq.s32.totalorder %s20, 0
      %p156 = por %p154, %p155
      %p157 = scmp.ne.s32.totalorder %s143, %s144
      %p158 = scmp.eq.s32.totalorder %s21, 1
      %p159 = por %p157, %p158
      %p161 = scmp.ne.s32.totalorder %s144, %s160
      %p162 = scmp.eq.s32.totalorder %s21, 0
      %p163 = por %p161, %p162
      %p164 = scmp.le.s32.totalorder 1, %s15
      %p165 = scmp.lt.s32.totalorder %s15, 3
      %p166 = pnand %p164, %p165
      %p167 = pneg %p166
      // Predicated region
      $region9: #{tpu_custom_call.1} parent=5 // pred_check
        _
      $region10: #{tpu_custom_call.1} parent=5 // pred_check_branch
        %169 = sbr.rel (%p166) target = $region12
      $region11: #{tpu_custom_call.1} parent=5 // pred_region
        %s170 = ssub.s32 %s15, 1
        // Predicated region
        $region13: #{tpu_custom_call.1} parent=11 // pred_check
          %p171 = pneg %p88
        $region14: #{tpu_custom_call.1} parent=11 // pred_check_branch
          %173 = sbr.rel (%p171) target = $region16
        $region15: #{tpu_custom_call.1} parent=11 // pred_region
          %s175 = ssub.s32 256, 256
          %176 = vsyncadd [#allocation3], %s175
          %s177 = sshll.u32 [#allocation2], 4
          %s178 = int_to_ptr.vmem [resolvable:$true] %s177
          %183 = dma.hbm_to_vmem [thread:$0]  %s2, 256, %s178, [#allocation3], 128, 128, 8
        $region16: #{tpu_custom_call.1} parent=11 // pred_fallthru
          _
        // Predicated region
        $region17: #{tpu_custom_call.1} parent=11 // pred_check
          %p184 = pneg %p109
        $region18: #{tpu_custom_call.1} parent=11 // pred_check_branch
          %186 = sbr.rel (%p184) target = $region20
        $region19: #{tpu_custom_call.1} parent=11 // pred_region
          _
        $region20: #{tpu_custom_call.1} parent=11 // pred_fallthru
          _
        // Predicated region
        $region21: #{tpu_custom_call.1} parent=11 // pred_check
          %p187 = pneg %p130
        $region22: #{tpu_custom_call.1} parent=11 // pred_check_branch
          %189 = sbr.rel (%p187) target = $region24
        $region23: #{tpu_custom_call.1} parent=11 // pred_region
          _
        $region24: #{tpu_custom_call.1} parent=11 // pred_fallthru
          _
      $region12: #{tpu_custom_call.1} parent=5 // pred_fallthru
        _
      %p190 = scmp.lt.s32.totalorder %s15, 2
      // Predicated region
      $region25: #{tpu_custom_call.1} parent=5 // pred_check
        %p191 = pneg %p190
      $region26: #{tpu_custom_call.1} parent=5 // pred_check_branch
        %193 = sbr.rel (%p191) target = $region28
      $region27: #{tpu_custom_call.1} parent=5 // pred_region
        // Predicated region
        $region29: #{tpu_custom_call.1} parent=27 // pred_check
          %p194 = pneg %p35
        $region30: #{tpu_custom_call.1} parent=27 // pred_check_branch
          %196 = sbr.rel (%p194) target = $region32
        $region31: #{tpu_custom_call.1} parent=27 // pred_region
          %s197 = smul.u32 8, %s15
          %p198 = scmp.lt.s32.totalorder %s197, 15
          %s199 = scalar_select %p198, %s197, 15
          %s200 = smul.addr %s199, 8
          %s201 = scalar_lea.vmem %s0, %s200
          %s202 = smul.u32 8, %s15
        $region32: #{tpu_custom_call.1} parent=27 // pred_fallthru
          _
        // Predicated region
        $region33: #{tpu_custom_call.1} parent=27 // pred_check
          %p203 = pneg %p61
        $region34: #{tpu_custom_call.1} parent=27 // pred_check_branch
          %205 = sbr.rel (%p203) target = $region36
        $region35: #{tpu_custom_call.1} parent=27 // pred_region
          %s206 = smul.u32 8, %s15
          %p207 = scmp.lt.s32.totalorder %s206, 15
          %s208 = scalar_select %p207, %s206, 15
          %s209 = smul.addr %s208, 8
          %s210 = scalar_lea.vmem %s1, %s209
          %s211 = smul.u32 8, %s15
        $region36: #{tpu_custom_call.1} parent=27 // pred_fallthru
          _
      $region28: #{tpu_custom_call.1} parent=5 // pred_fallthru
        _
      %p212 = scmp.le.s32.totalorder 1, %s15
      %p213 = scmp.lt.s32.totalorder %s15, 3
      %p214 = pnand %p212, %p213
      %p215 = pneg %p214
      // Predicated region
      $region37: #{tpu_custom_call.1} parent=5 // pred_check
        _
      $region38: #{tpu_custom_call.1} parent=5 // pred_check_branch
        %217 = sbr.rel (%p214) target = $region40
      $region39: #{tpu_custom_call.1} parent=5 // pred_region
        %s218 = ssub.s32 %s15, 1
        // Predicated region
        $region41: #{tpu_custom_call.1} parent=39 // pred_check
          %p219 = pneg %p88
        $region42: #{tpu_custom_call.1} parent=39 // pred_check_branch
          %221 = sbr.rel (%p219) target = $region44
        $region43: #{tpu_custom_call.1} parent=39 // pred_region
          %222 = dma.done [#allocation3], 256
        $region44: #{tpu_custom_call.1} parent=39 // pred_fallthru
          _
        %s223 = smul.u32 8, %s20
        %p224 = scmp.lt.s32.totalorder %s223, 15
        %s225 = scalar_select %p224, %s223, 15
        %s226 = smul.addr %s225, 8
        %s227 = scalar_lea.vmem %s0, %s226
        %p228 = pneg %p41
        %p229 = pneg %p38
        %s230 = smul.u32 8, %s20
        %p231 = scmp.lt.s32.totalorder %s230, 15
        %s232 = scalar_select %p231, %s230, 15
        %s233 = smul.addr %s232, 8
        %s234 = scalar_lea.vmem %s1, %s233
        %p235 = pneg %p67
        %p236 = pneg %p64
        %p237 = pneg %p88
        %p238 = pneg %p85
        %p239 = pneg %p109
        %p240 = pneg %p106
        %p241 = pneg %p130
        %p242 = pneg %p127
        %p243 = pneg %p156
        %p244 = pneg %p153
        %s245 = sand.u32 %s143, 1
        %s246 = scalar_lea.sflag [#allocation4], %s245
        %s247 = sand.u32 %s143, 1
        %s248 = smul.addr %s247, 8
        %s249 = scalar_lea.vmem [#allocation5], %s248
        %s250 = smul.u32 8, %s20
        %p251 = scmp.lt.s32.totalorder %s250, 15
        %s252 = scalar_select %p251, %s250, 15
        %s253 = smul.addr %s252, 8
        %s254 = scalar_lea.vmem %s0, %s253
        %s255 = smul.u32 8, %s20
        %s256 = smul.u32 8, %s20
        %p257 = scmp.lt.s32.totalorder %s256, 15
        %s258 = scalar_select %p257, %s256, 15
        %s259 = smul.addr %s258, 8
        %s260 = scalar_lea.vmem %s1, %s259
        %s261 = smul.u32 8, %s20
        %s262 = smul.u32 8, %s20
        %v263 = vld [vmem:[%s254] sm:$0xff]
        %v264 = vld [vmem:[%s254 + $0x8] sm:$0xff]
        %v265 = vld [vmem:[%s254 + $0x10] sm:$0xff]
        %v266 = vld [vmem:[%s254 + $0x18] sm:$0xff]
        %v267 = vld [vmem:[%s254 + $0x20] sm:$0xff]
        %v268 = vld [vmem:[%s254 + $0x28] sm:$0xff]
        %v269 = vld [vmem:[%s254 + $0x30] sm:$0xff]
        %v270 = vld [vmem:[%s254 + $0x38] sm:$0xff]
        %v271 = vld [vmem:[#allocation2] sm:$0xff]
        %v272 = vld [vmem:[#allocation2 + $0x8] sm:$0xff]
        %v273 = vld [vmem:[%s3] sm:$0x1]
        %v275 = vlaneseq
        %v276 = vshrl.u32 %v275, 7
        %v277 = vsub.s32 0, %v276
        %v278 = vrot.slane %v273, %v277
        %vm280 = vcmask 130048
        %v282 = vsel %vm280, %v263, 0
        %v285 = vsel %vm280, %v264, 0
        %v288 = vsel %vm280, %v265, 0
        %v291 = vsel %vm280, %v266, 0
        %v294 = vsel %vm280, %v267, 0
        %v297 = vsel %vm280, %v268, 0
        %v300 = vsel %vm280, %v269, 0
        %v303 = vsel %vm280, %v270, 0
        %305 = vmatprep.subr.mxu0 0.0
        %306 = vmatpush1.msra.mxu0 %v271
        %307 = vmatprep.subr.mxu0 0.0
        %308 = vmatpush1.msra.mxu0 %v272
        %309 = vmatprep.subr.mxu0 0.0
        %310 = vmatpush1.msra.mxu0 0.0
        %311 = vmatprep.subr.mxu0 0.0
        %312 = vmatpush1.msra.mxu0 0.0
        %313 = vmatprep.subr.mxu0 0.0
        %314 = vmatpush1.msra.mxu0 0.0
        %315 = vmatprep.subr.mxu0 0.0
        %316 = vmatpush1.msra.mxu0 0.0
        %317 = vmatprep.subr.mxu0 0.0
        %318 = vmatpush1.msra.mxu0 0.0
        %319 = vmatprep.subr.mxu0 0.0
        %320 = vmatpush1.msra.mxu0 0.0
        %321 = vmatprep.subr.mxu0 0.0
        %322 = vmatpush1.msra.mxu0 0.0
        %323 = vmatprep.subr.mxu0 0.0
        %324 = vmatpush1.msra.mxu0 0.0
        %325 = vmatprep.subr.mxu0 0.0
        %326 = vmatpush1.msra.mxu0 0.0
        %327 = vmatprep.subr.mxu0 0.0
        %328 = vmatpush1.msra.mxu0 0.0
        %329 = vmatprep.subr.mxu0 0.0
        %330 = vmatpush1.msra.mxu0 0.0
        %331 = vmatprep.subr.mxu0 0.0
        %332 = vmatpush1.msra.mxu0 0.0
        %333 = vmatprep.subr.mxu0 0.0
        %334 = vmatpush1.msra.mxu0 0.0
        %335 = vmatprep.subr.mxu0 0.0
        %336 = vmatpush1.msra.mxu0 0.0
        %337 = vmatprep.subr.mxu0 0.0
        %338 = vmatpush1.msra.mxu0 0.0
        %339 = vmatprep.subr.mxu0 0.0
        %340 = vmatpush1.msra.mxu0 0.0
        %341 = vmatprep.subr.mxu0 0.0
        %342 = vmatpush1.msra.mxu0 0.0
        %343 = vmatprep.subr.mxu0 0.0
        %344 = vmatpush1.msra.mxu0 0.0
        %345 = vmatprep.subr.mxu0 0.0
        %346 = vmatpush1.msra.mxu0 0.0
        %347 = vmatprep.subr.mxu0 0.0
        %348 = vmatpush1.msra.mxu0 0.0
        %349 = vmatprep.subr.mxu0 0.0
        %350 = vmatpush1.msra.mxu0 0.0
        %351 = vmatprep.subr.mxu0 0.0
        %352 = vmatpush1.msra.mxu0 0.0
        %353 = vmatprep.subr.mxu0 0.0
        %354 = vmatpush1.msra.mxu0 0.0
        %355 = vmatprep.subr.mxu0 0.0
        %356 = vmatpush1.msra.mxu0 0.0
        %357 = vmatprep.subr.mxu0 0.0
        %358 = vmatpush1.msra.mxu0 0.0
        %359 = vmatprep.subr.mxu0 0.0
        %360 = vmatpush1.msra.mxu0 0.0
        %361 = vmatprep.subr.mxu0 0.0
        %362 = vmatpush1.msra.mxu0 0.0
        %363 = vmatprep.subr.mxu0 0.0
        %364 = vmatpush1.msra.mxu0 0.0
        %365 = vmatprep.subr.mxu0 0.0
        %366 = vmatpush1.msra.mxu0 0.0
        %367 = vmatprep.subr.mxu0 0.0
        %368 = vmatpush1.msra.mxu0 0.0
        %369 = vmatprep.mubr.f32.mxu0 0.0
        %370 = vmatmul.mubr.f32.gmra.mrb[0].mxu0 %v282
        %v371 = vpop.f32.mrb[0].mxu0
        %v372 = vadd.f32 %v278, %v371
        %v373 = vpop.f32.mrb[0].mxu0
        %374 = vmatprep.mubr.f32.mxu0 0.0
        %375 = vmatmul.mubr.f32.gmra.mrb[0].mxu0 %v285
        %v376 = vpop.f32.mrb[0].mxu0
        %v377 = vadd.f32 %v278, %v376
        %v378 = vpop.f32.mrb[0].mxu0
        %379 = vmatprep.mubr.f32.mxu0 0.0
        %380 = vmatmul.mubr.f32.gmra.mrb[0].mxu0 %v288
        %v381 = vpop.f32.mrb[0].mxu0
        %v382 = vadd.f32 %v278, %v381
        %v383 = vpop.f32.mrb[0].mxu0
        %384 = vmatprep.mubr.f32.mxu0 0.0
        %385 = vmatmul.mubr.f32.gmra.mrb[0].mxu0 %v291
        %v386 = vpop.f32.mrb[0].mxu0
        %v387 = vadd.f32 %v278, %v386
        %v388 = vpop.f32.mrb[0].mxu0
        %389 = vmatprep.mubr.f32.mxu0 0.0
        %390 = vmatmul.mubr.f32.gmra.mrb[0].mxu0 %v294
        %v391 = vpop.f32.mrb[0].mxu0
        %v392 = vadd.f32 %v278, %v391
        %v393 = vpop.f32.mrb[0].mxu0
        %394 = vmatprep.mubr.f32.mxu0 0.0
        %395 = vmatmul.mubr.f32.gmra.mrb[0].mxu0 %v297
        %v396 = vpop.f32.mrb[0].mxu0
        %v397 = vadd.f32 %v278, %v396
        %v398 = vpop.f32.mrb[0].mxu0
        %399 = vmatprep.mubr.f32.mxu0 0.0
        %400 = vmatmul.mubr.f32.gmra.mrb[0].mxu0 %v300
        %v401 = vpop.f32.mrb[0].mxu0
        %v402 = vadd.f32 %v278, %v401
        %v403 = vpop.f32.mrb[0].mxu0
        %404 = vmatprep.mubr.f32.mxu0 0.0
        %405 = vmatmul.mubr.f32.gmra.mrb[0].mxu0 %v303
        %v406 = vpop.f32.mrb[0].mxu0
        %v407 = vadd.f32 %v278, %v406
        %v408 = vpop.f32.mrb[0].mxu0
        %409 = vdwg.mxu0
        %v410 = vtanh.pop %v372
        %v411 = vtanh.pop %v377
        %v412 = vtanh.pop %v382
        %v413 = vtanh.pop %v387
        %v414 = vtanh.pop %v392
        %v415 = vtanh.pop %v397
        %v416 = vtanh.pop %v402
        %v417 = vtanh.pop %v407
        %v418 = vld [vmem:[%s4] sm:$0x1]
        %v420 = vlaneseq
        %v421 = vshrl.u32 %v420, 7
        %v422 = vsub.s32 0, %v421
        %v423 = vrot.slane %v418, %v422
        %v425 = vmul.f32 %v410, %v423
        %v426 = vmul.f32 %v411, %v423
        %v427 = vmul.f32 %v412, %v423
        %v428 = vmul.f32 %v413, %v423
        %v429 = vmul.f32 %v414, %v423
        %v430 = vmul.f32 %v415, %v423
        %v431 = vmul.f32 %v416, %v423
        %v432 = vmul.f32 %v417, %v423
        %vm433 = vcmask 523264
        %v434 = vsel %vm433, %v425, 0.0
        %435 = vadd.xlane.f32.xlu0 %v434
        %v436 = vpop.xlane.xlu0 %435
        %v437 = vsel %vm433, %v426, 0.0
        %438 = vadd.xlane.f32.xlu0 %v437
        %v439 = vpop.xlane.xlu0 %438
        %v440 = vsel %vm433, %v427, 0.0
        %441 = vadd.xlane.f32.xlu0 %v440
        %v442 = vpop.xlane.xlu0 %441
        %v443 = vsel %vm433, %v428, 0.0
        %444 = vadd.xlane.f32.xlu0 %v443
        %v445 = vpop.xlane.xlu0 %444
        %v446 = vsel %vm433, %v429, 0.0
        %447 = vadd.xlane.f32.xlu0 %v446
        %v448 = vpop.xlane.xlu0 %447
        %v449 = vsel %vm433, %v430, 0.0
        %450 = vadd.xlane.f32.xlu0 %v449
        %v451 = vpop.xlane.xlu0 %450
        %v452 = vsel %vm433, %v431, 0.0
        %453 = vadd.xlane.f32.xlu0 %v452
        %v454 = vpop.xlane.xlu0 %453
        %v455 = vsel %vm433, %v432, 0.0
        %456 = vadd.xlane.f32.xlu0 %v455
        %v457 = vpop.xlane.xlu0 %456
        %v458 = vld [vmem:[%s260] sm:$0xff]
        %v459 = vld [vmem:[%s260 + $0x8] sm:$0xff]
        %v460 = vld [vmem:[%s260 + $0x10] sm:$0xff]
        %v461 = vld [vmem:[%s260 + $0x18] sm:$0xff]
        %v462 = vld [vmem:[%s260 + $0x20] sm:$0xff]
        %v463 = vld [vmem:[%s260 + $0x28] sm:$0xff]
        %v464 = vld [vmem:[%s260 + $0x30] sm:$0xff]
        %v465 = vld [vmem:[%s260 + $0x38] sm:$0xff]
        %vm466 = vcmp.eq.f32.partialorder %v458, 0.0
        %vm467 = vcmp.eq.f32.partialorder %v459, 0.0
        %vm468 = vcmp.eq.f32.partialorder %v460, 0.0
        %vm469 = vcmp.eq.f32.partialorder %v461, 0.0
        %vm470 = vcmp.eq.f32.partialorder %v462, 0.0
        %vm471 = vcmp.eq.f32.partialorder %v463, 0.0
        %vm472 = vcmp.eq.f32.partialorder %v464, 0.0
        %vm473 = vcmp.eq.f32.partialorder %v465, 0.0
        %v474 = vsel %vm466, -1e+09, %v436
        %v475 = vsel %vm467, -1e+09, %v439
        %v476 = vsel %vm468, -1e+09, %v442
        %v477 = vsel %vm469, -1e+09, %v445
        %v478 = vsel %vm470, -1e+09, %v448
        %v479 = vsel %vm471, -1e+09, %v451
        %v480 = vsel %vm472, -1e+09, %v454
        %v481 = vsel %vm473, -1e+09, %v457
        %vm482 = vcmask 7168
        %v483 = vsel %vm482, %v474, -inf
        %v484 = vrot.slane %v483, 4
        %v485 = vmax.f32 %v483, %v484
        %v486 = vrot.slane %v485, 2
        %v487 = vmax.f32 %v485, %v486
        %v488 = vrot.slane %v487, 1
        %v489 = vmax.f32 %v487, %v488
        %v490 = vsel %vm482, %v475, -inf
        %v491 = vrot.slane %v490, 4
        %v492 = vmax.f32 %v490, %v491
        %v493 = vrot.slane %v492, 2
        %v494 = vmax.f32 %v492, %v493
        %v495 = vrot.slane %v494, 1
        %v496 = vmax.f32 %v494, %v495
        %v497 = vsel %vm482, %v476, -inf
        %v498 = vrot.slane %v497, 4
        %v499 = vmax.f32 %v497, %v498
        %v500 = vrot.slane %v499, 2
        %v501 = vmax.f32 %v499, %v500
        %v502 = vrot.slane %v501, 1
        %v503 = vmax.f32 %v501, %v502
        %v504 = vsel %vm482, %v477, -inf
        %v505 = vrot.slane %v504, 4
        %v506 = vmax.f32 %v504, %v505
        %v507 = vrot.slane %v506, 2
        %v508 = vmax.f32 %v506, %v507
        %v509 = vrot.slane %v508, 1
        %v510 = vmax.f32 %v508, %v509
        %v511 = vsel %vm482, %v478, -inf
        %v512 = vrot.slane %v511, 4
        %v513 = vmax.f32 %v511, %v512
        %v514 = vrot.slane %v513, 2
        %v515 = vmax.f32 %v513, %v514
        %v516 = vrot.slane %v515, 1
        %v517 = vmax.f32 %v515, %v516
        %v518 = vsel %vm482, %v479, -inf
        %v519 = vrot.slane %v518, 4
        %v520 = vmax.f32 %v518, %v519
        %v521 = vrot.slane %v520, 2
        %v522 = vmax.f32 %v520, %v521
        %v523 = vrot.slane %v522, 1
        %v524 = vmax.f32 %v522, %v523
        %v525 = vsel %vm482, %v480, -inf
        %v526 = vrot.slane %v525, 4
        %v527 = vmax.f32 %v525, %v526
        %v528 = vrot.slane %v527, 2
        %v529 = vmax.f32 %v527, %v528
        %v530 = vrot.slane %v529, 1
        %v531 = vmax.f32 %v529, %v530
        %v532 = vsel %vm482, %v481, -inf
        %v533 = vrot.slane %v532, 4
        %v534 = vmax.f32 %v532, %v533
        %v535 = vrot.slane %v534, 2
        %v536 = vmax.f32 %v534, %v535
        %v537 = vrot.slane %v536, 1
        %v538 = vmax.f32 %v536, %v537
        %v539 = vsub.f32 %v474, %v489
        %v540 = vsub.f32 %v475, %v496
        %v541 = vsub.f32 %v476, %v503
        %v542 = vsub.f32 %v477, %v510
        %v543 = vsub.f32 %v478, %v517
        %v544 = vsub.f32 %v479, %v524
        %v545 = vsub.f32 %v480, %v531
        %v546 = vsub.f32 %v481, %v538
        %v547 = vmul.f32 %v539, 1.442695
        %v548 = vpow.pop %v547
        %v549 = vmul.f32 %v540, 1.442695
        %v550 = vpow.pop %v549
        %v551 = vmul.f32 %v541, 1.442695
        %v552 = vpow.pop %v551
        %v553 = vmul.f32 %v542, 1.442695
        %v554 = vpow.pop %v553
        %v555 = vmul.f32 %v543, 1.442695
        %v556 = vpow.pop %v555
        %v557 = vmul.f32 %v544, 1.442695
        %v558 = vpow.pop %v557
        %v559 = vmul.f32 %v545, 1.442695
        %v560 = vpow.pop %v559
        %v561 = vmul.f32 %v546, 1.442695
        %v562 = vpow.pop %v561
        %v563 = vsel %vm482, %v548, 0.0
        %v564 = vrot.slane %v563, 4
        %v565 = vadd.f32 %v563, %v564
        %v566 = vrot.slane %v565, 2
        %v567 = vadd.f32 %v565, %v566
        %v568 = vrot.slane %v567, 1
        %v569 = vadd.f32 %v567, %v568
        %v570 = vsel %vm482, %v550, 0.0
        %v571 = vrot.slane %v570, 4
        %v572 = vadd.f32 %v570, %v571
        %v573 = vrot.slane %v572, 2
        %v574 = vadd.f32 %v572, %v573
        %v575 = vrot.slane %v574, 1
        %v576 = vadd.f32 %v574, %v575
        %v577 = vsel %vm482, %v552, 0.0
        %v578 = vrot.slane %v577, 4
        %v579 = vadd.f32 %v577, %v578
        %v580 = vrot.slane %v579, 2
        %v581 = vadd.f32 %v579, %v580
        %v582 = vrot.slane %v581, 1
        %v583 = vadd.f32 %v581, %v582
        %v584 = vsel %vm482, %v554, 0.0
        %v585 = vrot.slane %v584, 4
        %v586 = vadd.f32 %v584, %v585
        %v587 = vrot.slane %v586, 2
        %v588 = vadd.f32 %v586, %v587
        %v589 = vrot.slane %v588, 1
        %v590 = vadd.f32 %v588, %v589
        %v591 = vsel %vm482, %v556, 0.0
        %v592 = vrot.slane %v591, 4
        %v593 = vadd.f32 %v591, %v592
        %v594 = vrot.slane %v593, 2
        %v595 = vadd.f32 %v593, %v594
        %v596 = vrot.slane %v595, 1
        %v597 = vadd.f32 %v595, %v596
        %v598 = vsel %vm482, %v558, 0.0
        %v599 = vrot.slane %v598, 4
        %v600 = vadd.f32 %v598, %v599
        %v601 = vrot.slane %v600, 2
        %v602 = vadd.f32 %v600, %v601
        %v603 = vrot.slane %v602, 1
        %v604 = vadd.f32 %v602, %v603
        %v605 = vsel %vm482, %v560, 0.0
        %v606 = vrot.slane %v605, 4
        %v607 = vadd.f32 %v605, %v606
        %v608 = vrot.slane %v607, 2
        %v609 = vadd.f32 %v607, %v608
        %v610 = vrot.slane %v609, 1
        %v611 = vadd.f32 %v609, %v610
        %v612 = vsel %vm482, %v562, 0.0
        %v613 = vrot.slane %v612, 4
        %v614 = vadd.f32 %v612, %v613
        %v615 = vrot.slane %v614, 2
        %v616 = vadd.f32 %v614, %v615
        %v617 = vrot.slane %v616, 1
        %v618 = vadd.f32 %v616, %v617
        %v619 = vrcp.pop %v569
        %v620 = vrcp.pop %v576
        %v621 = vrcp.pop %v583
        %v622 = vrcp.pop %v590
        %v623 = vrcp.pop %v597
        %v624 = vrcp.pop %v604
        %v625 = vrcp.pop %v611
        %v626 = vrcp.pop %v618
        %v627 = vmul.f32 %v548, %v619
        %v628 = vmul.f32 %v550, %v620
        %v629 = vmul.f32 %v552, %v621
        %v630 = vmul.f32 %v554, %v622
        %v631 = vmul.f32 %v556, %v623
        %v632 = vmul.f32 %v558, %v624
        %v633 = vmul.f32 %v560, %v625
        %v634 = vmul.f32 %v562, %v626
        %636 = vset.pattern.permute.xlu0 0
        %637 = vperm.xlu0 %636, %v627
        %v638 = vpop.permute.xlu0 %637
        %641 = vset.pattern.permute.xlu0 0
        %642 = vperm.xlu0 %641, %v628
        %v643 = vpop.permute.xlu0 %642
        %646 = vset.pattern.permute.xlu0 0
        %647 = vperm.xlu0 %646, %v629
        %v648 = vpop.permute.xlu0 %647
        %651 = vset.pattern.permute.xlu0 0
        %652 = vperm.xlu0 %651, %v630
        %v653 = vpop.permute.xlu0 %652
        %656 = vset.pattern.permute.xlu0 0
        %657 = vperm.xlu0 %656, %v631
        %v658 = vpop.permute.xlu0 %657
        %661 = vset.pattern.permute.xlu0 0
        %662 = vperm.xlu0 %661, %v632
        %v663 = vpop.permute.xlu0 %662
        %666 = vset.pattern.permute.xlu0 0
        %667 = vperm.xlu0 %666, %v633
        %v668 = vpop.permute.xlu0 %667
        %671 = vset.pattern.permute.xlu0 0
        %672 = vperm.xlu0 %671, %v634
        %v673 = vpop.permute.xlu0 %672
        %v675 = vmul.f32 %v638, %v263
        %v676 = vmul.f32 %v643, %v264
        %v677 = vmul.f32 %v648, %v265
        %v678 = vmul.f32 %v653, %v266
        %v679 = vmul.f32 %v658, %v267
        %v680 = vmul.f32 %v663, %v268
        %v681 = vmul.f32 %v668, %v269
        %v682 = vmul.f32 %v673, %v270
        %v683 = vsel %vm280, %v675, 0.0
        %v684 = vrot.slane %v683, 4
        %v685 = vadd.f32 %v683, %v684
        %v686 = vrot.slane %v685, 2
        %v687 = vadd.f32 %v685, %v686
        %v688 = vrot.slane %v687, 1
        %v689 = vadd.f32 %v687, %v688
        %v690 = vsel %vm280, %v676, 0.0
        %v691 = vrot.slane %v690, 4
        %v692 = vadd.f32 %v690, %v691
        %v693 = vrot.slane %v692, 2
        %v694 = vadd.f32 %v692, %v693
        %v695 = vrot.slane %v694, 1
        %v696 = vadd.f32 %v694, %v695
        %v697 = vsel %vm280, %v677, 0.0
        %v698 = vrot.slane %v697, 4
        %v699 = vadd.f32 %v697, %v698
        %v700 = vrot.slane %v699, 2
        %v701 = vadd.f32 %v699, %v700
        %v702 = vrot.slane %v701, 1
        %v703 = vadd.f32 %v701, %v702
        %v704 = vsel %vm280, %v678, 0.0
        %v705 = vrot.slane %v704, 4
        %v706 = vadd.f32 %v704, %v705
        %v707 = vrot.slane %v706, 2
        %v708 = vadd.f32 %v706, %v707
        %v709 = vrot.slane %v708, 1
        %v710 = vadd.f32 %v708, %v709
        %v711 = vsel %vm280, %v679, 0.0
        %v712 = vrot.slane %v711, 4
        %v713 = vadd.f32 %v711, %v712
        %v714 = vrot.slane %v713, 2
        %v715 = vadd.f32 %v713, %v714
        %v716 = vrot.slane %v715, 1
        %v717 = vadd.f32 %v715, %v716
        %v718 = vsel %vm280, %v680, 0.0
        %v719 = vrot.slane %v718, 4
        %v720 = vadd.f32 %v718, %v719
        %v721 = vrot.slane %v720, 2
        %v722 = vadd.f32 %v720, %v721
        %v723 = vrot.slane %v722, 1
        %v724 = vadd.f32 %v722, %v723
        %v725 = vsel %vm280, %v681, 0.0
        %v726 = vrot.slane %v725, 4
        %v727 = vadd.f32 %v725, %v726
        %v728 = vrot.slane %v727, 2
        %v729 = vadd.f32 %v727, %v728
        %v730 = vrot.slane %v729, 1
        %v731 = vadd.f32 %v729, %v730
        %v732 = vsel %vm280, %v682, 0.0
        %v733 = vrot.slane %v732, 4
        %v734 = vadd.f32 %v732, %v733
        %v735 = vrot.slane %v734, 2
        %v736 = vadd.f32 %v734, %v735
        %v737 = vrot.slane %v736, 1
        %v738 = vadd.f32 %v736, %v737
        %vm739 = vcmask 122880
        %740 = vst.msk [vmem:[%s249] sm:$0x1] %vm739, %v689
        %741 = vst.msk [vmem:[%s249 + $0x1] sm:$0x1] %vm739, %v696
        %742 = vst.msk [vmem:[%s249 + $0x2] sm:$0x1] %vm739, %v703
        %743 = vst.msk [vmem:[%s249 + $0x3] sm:$0x1] %vm739, %v710
        %744 = vst.msk [vmem:[%s249 + $0x4] sm:$0x1] %vm739, %v717
        %745 = vst.msk [vmem:[%s249 + $0x5] sm:$0x1] %vm739, %v724
        %746 = vst.msk [vmem:[%s249 + $0x6] sm:$0x1] %vm739, %v731
        %747 = vst.msk [vmem:[%s249 + $0x7] sm:$0x1] %vm739, %v738
        %s748 = sand.u32 %s143, 1
        %s749 = scalar_lea.sflag [#allocation4], %s748
        %s750 = sand.u32 %s143, 1
        %s751 = smul.addr %s750, 8
        %s752 = scalar_lea.vmem [#allocation5], %s751
        // Predicated region
        $region45: #{tpu_custom_call.1} parent=39 // pred_check
          %p753 = pneg %p153
        $region46: #{tpu_custom_call.1} parent=39 // pred_check_branch
          %755 = sbr.rel (%p753) target = $region48
        $region47: #{tpu_custom_call.1} parent=39 // pred_region
          %s756 = smul.u32 8, %s20
          %s758 = ssub.s32 128, 128
          %759 = vsyncadd %s749, %s758
          %s760 = smul.addr %s756, 16
          %s761 = scalar_lea.hbm %s5, %s760
          %s762 = sshll.u32 %s752, 4
          %s763 = int_to_ptr.vmem [resolvable:$true] %s762
          %768 = dma.vmem_to_hbm [thread:$0]  %s763, 128, %s761, %s749, 16, 16, 1
        $region48: #{tpu_custom_call.1} parent=39 // pred_fallthru
          _
      $region40: #{tpu_custom_call.1} parent=5 // pred_fallthru
        _
      %p769 = scmp.le.s32.totalorder 2, %s15
      // Predicated region
      $region49: #{tpu_custom_call.1} parent=5 // pred_check
        %p770 = pneg %p769
      $region50: #{tpu_custom_call.1} parent=5 // pred_check_branch
        %772 = sbr.rel (%p770) target = $region52
      $region51: #{tpu_custom_call.1} parent=5 // pred_region
        %s773 = ssub.s32 %s15, 2
        // Predicated region
        $region53: #{tpu_custom_call.1} parent=51 // pred_check
          %p774 = pneg %p159
        $region54: #{tpu_custom_call.1} parent=51 // pred_check_branch
          %776 = sbr.rel (%p774) target = $region56
        $region55: #{tpu_custom_call.1} parent=51 // pred_region
          %s777 = sand.u32 %s144, 1
          %s778 = scalar_lea.sflag [#allocation4], %s777
          %s779 = sand.u32 %s144, 1
          %s780 = smul.addr %s779, 8
          %s781 = scalar_lea.vmem [#allocation5], %s780
          %782 = dma.done %s778, 128
        $region56: #{tpu_custom_call.1} parent=51 // pred_fallthru
          _
      $region52: #{tpu_custom_call.1} parent=5 // pred_fallthru
        _
    $region6: #{tpu_custom_call.1} parent=1 // loop_footer
      %s19 = sadd.s32 1, %s15
    $region7: #{tpu_custom_call.1} parent=1 // loop_footer_branch
      %14 = sbr.rel target = $region3
    $region8: #{tpu_custom_call.1} parent=1 // loop_exit
      _
    %783 = vsyncpa [#allocation3], 1
    %s784 = scalar_lea.sflag [#allocation3], 1
    %785 = vsyncpa %s784, 1
    %786 = vsyncpa [#allocation4], 1
    %s787 = scalar_lea.sflag [#allocation4], 1
    %788 = vsyncpa %s787, 1

</llo_original>
